<compile_context>
chip_gen: v7x
topology: tpu7x:2x2x1
jax: 0.10.0
libtpu: 0.0.40
codegen_flags: <defaults>
</compile_context>

<pallas_src>
import functools

import jax
import jax.numpy as jnp
from jax.experimental import pallas as pl
from jax.experimental.pallas import tpu as pltpu


def _batchnorm_kernel(x_ref, gamma_ref, beta_ref, o_ref, *, eps):
    # x_ref: (n_batch, tile_d); gamma_ref / beta_ref: (1, tile_d)
    x = x_ref[...].astype(jnp.float32)
    inv_n = 1.0 / x.shape[0]  # static Python float, folded at trace time

    # Two-pass biased mean/variance over the batch (sublane) axis.  Matches
    # torch.var(unbiased=False) and avoids E[x^2] - mu^2 cancellation issues.
    mu = jnp.sum(x, axis=0, keepdims=True) * inv_n
    diff = x - mu
    var = jnp.sum(diff * diff, axis=0, keepdims=True) * inv_n
    inv_std = jax.lax.rsqrt(var + eps)  # EUP op; effectively free vs. memory

    # Fold the affine into a per-neuron scale/bias: out = x * a + b.
    a = gamma_ref[...].astype(jnp.float32) * inv_std
    b = beta_ref[...].astype(jnp.float32) - mu * a
    o_ref[...] = (x * a + b).astype(o_ref.dtype)


def _pick_tile_d(n_batch, n_neurons, itemsize, vmem_budget_bytes=24 << 20):
    """Pick the lane tile: multiple of 128, as large as the VMEM budget allows.

    Budget accounts for double-buffered input + output slabs plus the f32
    working copy inside the kernel:
      ~ (2*in + 2*out) * itemsize + f32 working  ≈ (4*itemsize + 4) bytes/elem.
    """
    if n_neurons <= 128:
        # A block equal to the full array extent is always legal (< 128 lanes ok).
        return n_neurons
    bytes_per_lane = n_batch * (4 * itemsize + 4)
    max_lanes = max(128, vmem_budget_bytes // max(bytes_per_lane, 1))
    tile = min(2048, (max_lanes // 128) * 128)
    tile = max(tile, 128)
    if tile >= n_neurons:
        return n_neurons  # single full-width tile
    return tile


def custom_batchnorm_forward(x, gamma, beta, eps=1e-5, tile_d=None):
    """Forward pass of CustomBatchNormManualFunction.

    Args:
      x:      (n_batch, n_neurons) input.
      gamma:  (n_neurons,) per-neuron scale.
      beta:   (n_neurons,) per-neuron shift.
      eps:    small constant added to the variance.
      tile_d: optional lane-tile override (multiple of 128, or >= n_neurons).
    Returns:
      (n_batch, n_neurons) batch-normalized tensor, same dtype as x.
    """
    n_batch, n_neurons = x.shape
    gamma2d = gamma.reshape(1, n_neurons)
    beta2d = beta.reshape(1, n_neurons)

    if tile_d is None:
        tile_d = _pick_tile_d(n_batch, n_neurons, x.dtype.itemsize)
    tile_d = min(tile_d, n_neurons)
    num_tiles = pl.cdiv(n_neurons, tile_d)

    # TODO(synk): for extremely tall batches where even a 128-lane slab of the
    # full batch cannot fit in VMEM, a two-pass kernel (sum/sumsq accumulation
    # over batch tiles, then a second apply pass) is required; MLP-sized inputs
    # never hit that regime.

    kernel = functools.partial(_batchnorm_kernel, eps=eps)

    return pl.pallas_call(
        kernel,
        out_shape=jax.ShapeDtypeStruct((n_batch, n_neurons), x.dtype),
        grid=(num_tiles,),
        in_specs=[
            pl.BlockSpec((n_batch, tile_d), lambda j: (0, j)),
            pl.BlockSpec((1, tile_d), lambda j: (0, j)),
            pl.BlockSpec((1, tile_d), lambda j: (0, j)),
        ],
        out_specs=pl.BlockSpec((n_batch, tile_d), lambda j: (0, j)),
        compiler_params=pltpu.CompilerParams(
            # Neuron tiles are fully independent: shard across TensorCores on v7x.
            dimension_semantics=("parallel",),
            # <= physical VMEM on all generations (incl. v7x's 64 MiB); gives the
            # pipeline headroom beyond v5e's 16 MiB scoped default.
            vmem_limit_bytes=32 * 1024 * 1024,
        ),
    )(x, gamma2d, beta2d)


def _reference(x, gamma, beta, eps):
    mu = jnp.mean(x, axis=0)
    var = jnp.var(x, axis=0)  # biased (unbiased=False)
    x_hat = (x - mu) / jnp.sqrt(var + eps)
    return gamma * x_hat + beta


if __name__ == "__main__":
    eps = 1e-5

    # Primary small case matching the module's (n_batch, n_neurons) layout and
    # its deterministic init: gamma = ones, beta = zeros.
    key = jax.random.PRNGKey(0)
    n_batch, n_neurons = 8, 32
    x = jax.random.normal(key, (n_batch, n_neurons), dtype=jnp.float32)
    gamma = jnp.ones((n_neurons,), dtype=jnp.float32)
    beta = jnp.zeros((n_neurons,), dtype=jnp.float32)

    out = custom_batchnorm_forward(x, gamma, beta, eps)
    out = jax.block_until_ready(out)
    ref = _reference(x, gamma, beta, eps)
    assert jnp.allclose(out, ref, atol=1e-5, rtol=1e-5), "mismatch vs reference"

    # Second small check exercising the multi-tile (lane-tiled) path with
    # non-trivial gamma/beta.
    k1, k2, k3 = jax.random.split(jax.random.PRNGKey(0), 3)
    n_batch2, n_neurons2 = 16, 384
    x2 = jax.random.normal(k1, (n_batch2, n_neurons2), dtype=jnp.float32)
    gamma2 = jax.random.normal(k2, (n_neurons2,), dtype=jnp.float32)
    beta2 = jax.random.normal(k3, (n_neurons2,), dtype=jnp.float32)

    out2 = custom_batchnorm_forward(x2, gamma2, beta2, eps, tile_d=128)
    out2 = jax.block_until_ready(out2)
    ref2 = _reference(x2, gamma2, beta2, eps)
    assert jnp.allclose(out2, ref2, atol=1e-4, rtol=1e-4), "tiled mismatch vs reference"

    print("KERNEL_OK")
</pallas_src>

<mosaic_0001>
module attributes {stable_mosaic.version = 11 : i64} {
  func.func @_batchnorm_kernel(%arg0: i32, %arg1: memref<8x32xf32, #tpu.memory_space<vmem>>, %arg2: memref<1x32xf32, #tpu.memory_space<vmem>>, %arg3: memref<1x32xf32, #tpu.memory_space<vmem>>, %arg4: memref<8x32xf32, #tpu.memory_space<vmem>>) attributes {dimension_semantics = [#tpu.dimension_semantics<parallel>], iteration_bounds = array<i64: 1>, scalar_prefetch = 0 : i64, scratch_operands = 0 : i64, tpu.core_type = #tpu.core_type<tc>, window_params = [{transform_indices = @transform_0, window_bounds = array<i64: 8, 32>}, {transform_indices = @transform_1, window_bounds = array<i64: 1, 32>}, {transform_indices = @transform_2, window_bounds = array<i64: 1, 32>}, {transform_indices = @transform_3, window_bounds = array<i64: 8, 32>}]} {
    %c0 = arith.constant 0 : index
    %c0_0 = arith.constant 0 : index
    %0 = vector.load %arg1[%c0, %c0_0] : memref<8x32xf32, #tpu.memory_space<vmem>>, vector<8x32xf32>
    %cst = arith.constant dense<0.000000e+00> : vector<32xf32>
    %1 = vector.multi_reduction <add>, %0, %cst [0] : vector<8x32xf32> to vector<32xf32>
    %2 = vector.shape_cast %1 : vector<32xf32> to vector<1x32xf32>
    %cst_1 = arith.constant 1.250000e-01 : f32
    %3 = vector.broadcast %cst_1 : f32 to vector<1x32xf32>
    %4 = arith.mulf %2, %3 : vector<1x32xf32>
    %5 = vector.broadcast %4 : vector<1x32xf32> to vector<8x32xf32>
    %6 = arith.subf %0, %5 : vector<8x32xf32>
    %7 = arith.mulf %6, %6 : vector<8x32xf32>
    %cst_2 = arith.constant dense<0.000000e+00> : vector<32xf32>
    %8 = vector.multi_reduction <add>, %7, %cst_2 [0] : vector<8x32xf32> to vector<32xf32>
    %9 = vector.shape_cast %8 : vector<32xf32> to vector<1x32xf32>
    %cst_3 = arith.constant 1.250000e-01 : f32
    %10 = vector.broadcast %cst_3 : f32 to vector<1x32xf32>
    %11 = arith.mulf %9, %10 : vector<1x32xf32>
    %cst_4 = arith.constant 9.99999974E-6 : f32
    %12 = vector.broadcast %cst_4 : f32 to vector<1x32xf32>
    %13 = arith.addf %11, %12 : vector<1x32xf32>
    %14 = math.rsqrt %13 : vector<1x32xf32>
    %c0_5 = arith.constant 0 : index
    %c0_6 = arith.constant 0 : index
    %15 = vector.load %arg2[%c0_5, %c0_6] : memref<1x32xf32, #tpu.memory_space<vmem>>, vector<1x32xf32>
    %16 = arith.mulf %15, %14 : vector<1x32xf32>
    %c0_7 = arith.constant 0 : index
    %c0_8 = arith.constant 0 : index
    %17 = vector.load %arg3[%c0_7, %c0_8] : memref<1x32xf32, #tpu.memory_space<vmem>>, vector<1x32xf32>
    %18 = arith.mulf %4, %16 : vector<1x32xf32>
    %19 = arith.subf %17, %18 : vector<1x32xf32>
    %20 = vector.broadcast %16 : vector<1x32xf32> to vector<8x32xf32>
    %21 = arith.mulf %0, %20 : vector<8x32xf32>
    %22 = vector.broadcast %19 : vector<1x32xf32> to vector<8x32xf32>
    %23 = arith.addf %21, %22 : vector<8x32xf32>
    %c0_9 = arith.constant 0 : index
    %c0_10 = arith.constant 0 : index
    %24 = vector.load %arg4[%c0_9, %c0_10] : memref<8x32xf32, #tpu.memory_space<vmem>>, vector<8x32xf32>
    tpu.vector_store %arg4[%c0_9, %c0_10], %23 {strides = array<i32>} : memref<8x32xf32, #tpu.memory_space<vmem>>, vector<8x32xf32>,
    return
  }
  func.func @transform_0(%arg0: i32) -> (i32, i32) {
    %c0_i32 = arith.constant 0 : i32
    %c0_i32_0 = arith.constant 0 : i32
    return %c0_i32, %arg0 : i32, i32
  }
  func.func @transform_1(%arg0: i32) -> (i32, i32) {
    %c0_i32 = arith.constant 0 : i32
    %c0_i32_0 = arith.constant 0 : i32
    return %c0_i32, %arg0 : i32, i32
  }
  func.func @transform_2(%arg0: i32) -> (i32, i32) {
    %c0_i32 = arith.constant 0 : i32
    %c0_i32_0 = arith.constant 0 : i32
    return %c0_i32, %arg0 : i32, i32
  }
  func.func @transform_3(%arg0: i32) -> (i32, i32) {
    %c0_i32 = arith.constant 0 : i32
    %c0_i32_0 = arith.constant 0 : i32
    return %c0_i32, %arg0 : i32, i32
  }
}

</mosaic_0001>

<llo_original>
// kernel: tpu_custom_call.1
$region0: #{tpu_custom_call.1}
  #allocation0 [shape = 'u32[]', space=smem, size = 0x4, offset = 0x4, fixed_abs, tag = 'smem constant byte address 0x4 - core index']
  #allocation1 [shape = 'u32[144,128]{1,0:T(1,128)}', space=vmem, size = 0x12000, scoped, tag = 'internal scratch']
  %s0 = inlined_call_operand.hbm [shape: f32[8,32], index: 0, kind: input, shape index: {}]
  %s1 = inlined_call_operand.vmem [shape: f32[1,32], index: 1, kind: input, shape index: {}]
  %s2 = inlined_call_operand.vmem [shape: f32[1,32], index: 2, kind: input, shape index: {}]
  %s3 = inlined_call_operand.hbm [shape: f32[8,32], index: 3, kind: output, shape index: {}]
  %s4 = sld [smem:[#allocation0]]
  $region26: #{tpu_custom_call.1} parent=0
    _
  %s6 = ssub.s32 1, %s4
  %s7 = scalar_select 0, %s6, %s4
  $region1: #{tpu_custom_call.1} parent=0
    #allocation2 [shape = 'u8[4096]{0}', space=vmem, size = 0x1000, scoped, tag = 'input window, operand 0, single buffered']
    #allocation3 [shape = 's32[1]{0}', space=sflag, size = 0x4, scoped, tag = 'scoped memory for tpu_custom_call.1']
    #allocation4 [shape = 's32[1]{0}', space=sflag, size = 0x4, scoped, tag = 'scoped memory for tpu_custom_call.1']
    #allocation5 [shape = 'u8[4096]{0}', space=vmem, size = 0x1000, scoped, tag = 'output window, operand 0, single buffered']
    %8 = vsyncpa [#allocation3], 0
    %9 = vsyncpa [#allocation4], 0
    // Predicated region
    $region2: #{tpu_custom_call.1} parent=1 // pred_check
      _
    $region3: #{tpu_custom_call.1} parent=1 // pred_check_branch
      %11 = sbr.rel (0) target = $region5
    $region4: #{tpu_custom_call.1} parent=1 // pred_region
      %s13 = ssub.s32 128, 128
      %14 = vsyncadd [#allocation3], %s13
      %s16 = sshll.u32 [#allocation2], 4
      %s17 = int_to_ptr.vmem [resolvable:$true] %s16
      %19 = dma.hbm_to_vmem [thread:$0]  %s0, 128, %s17, [#allocation3]
    $region5: #{tpu_custom_call.1} parent=1 // pred_fallthru
      _
    // Predicated region
    $region6: #{tpu_custom_call.1} parent=1 // pred_check
      _
    $region7: #{tpu_custom_call.1} parent=1 // pred_check_branch
      %21 = sbr.rel (0) target = $region9
    $region8: #{tpu_custom_call.1} parent=1 // pred_region
      _
    $region9: #{tpu_custom_call.1} parent=1 // pred_fallthru
      _
    // Predicated region
    $region10: #{tpu_custom_call.1} parent=1 // pred_check
      _
    $region11: #{tpu_custom_call.1} parent=1 // pred_check_branch
      %23 = sbr.rel (0) target = $region13
    $region12: #{tpu_custom_call.1} parent=1 // pred_region
      _
    $region13: #{tpu_custom_call.1} parent=1 // pred_fallthru
      _
    // Predicated region
    $region14: #{tpu_custom_call.1} parent=1 // pred_check
      _
    $region15: #{tpu_custom_call.1} parent=1 // pred_check_branch
      %25 = sbr.rel (0) target = $region17
    $region16: #{tpu_custom_call.1} parent=1 // pred_region
      %26 = dma.done [#allocation3], 128
    $region17: #{tpu_custom_call.1} parent=1 // pred_fallthru
      _
    %v27 = vld [vmem:[#allocation2] sm:$0xff]
    %vm28 = vcmask 261120
    %v29 = vsel %vm28, %v27, 0.0
    %v30 = vrot.slane %v29, 4
    %v31 = vadd.f32 %v29, %v30
    %v32 = vrot.slane %v31, 2
    %v33 = vadd.f32 %v31, %v32
    %v34 = vrot.slane %v33, 1
    %v35 = vadd.f32 %v33, %v34
    %v36 = vmul.f32 %v35, 0.125
    %v37 = vsub.f32 %v27, %v36
    %v38 = vmul.f32 %v37, %v37
    %v39 = vsel %vm28, %v38, 0.0
    %v40 = vrot.slane %v39, 4
    %v41 = vadd.f32 %v39, %v40
    %v42 = vrot.slane %v41, 2
    %v43 = vadd.f32 %v41, %v42
    %v44 = vrot.slane %v43, 1
    %v45 = vadd.f32 %v43, %v44
    %v46 = vmul.f32 %v45, 0.125
    %v47 = vadd.f32 %v46, 1e-05
    %v48 = vrsqrt.pop %v47
    %v49 = vld [vmem:[%s1] sm:$0x1]
    %v50 = vmul.f32 %v49, %v48
    %v51 = vld [vmem:[%s2] sm:$0x1]
    %v52 = vmul.f32 %v36, %v50
    %v53 = vsub.f32 %v51, %v52
    %v55 = vlaneseq
    %v56 = vshrl.u32 %v55, 7
    %v57 = vsub.s32 0, %v56
    %v58 = vrot.slane %v50, %v57
    %v60 = vmul.f32 %v27, %v58
    %v62 = vlaneseq
    %v63 = vshrl.u32 %v62, 7
    %v64 = vsub.s32 0, %v63
    %v65 = vrot.slane %v53, %v64
    %v67 = vadd.f32 %v60, %v65
    %68 = vst.msk [vmem:[#allocation5] sm:$0xff] %vm28, %v67
    // Predicated region
    $region18: #{tpu_custom_call.1} parent=1 // pred_check
      _
    $region19: #{tpu_custom_call.1} parent=1 // pred_check_branch
      %70 = sbr.rel (0) target = $region21
    $region20: #{tpu_custom_call.1} parent=1 // pred_region
      %s72 = ssub.s32 128, 128
      %73 = vsyncadd [#allocation4], %s72
      %s75 = sshll.u32 [#allocation5], 4
      %s76 = int_to_ptr.vmem [resolvable:$true] %s75
      %78 = dma.vmem_to_hbm [thread:$0]  %s76, 128, %s3, [#allocation4]
    $region21: #{tpu_custom_call.1} parent=1 // pred_fallthru
      _
    // Predicated region
    $region22: #{tpu_custom_call.1} parent=1 // pred_check
      _
    $region23: #{tpu_custom_call.1} parent=1 // pred_check_branch
      %80 = sbr.rel (0) target = $region25
    $region24: #{tpu_custom_call.1} parent=1 // pred_region
      %81 = dma.done [#allocation4], 128
    $region25: #{tpu_custom_call.1} parent=1 // pred_fallthru
      _
    %82 = vsyncpa [#allocation3], 1
    %83 = vsyncpa [#allocation4], 1

</llo_original>
